<compile_context>
chip_gen: v5e
topology: v5e:2x2
jax: 0.10.0
libtpu: 0.0.40
codegen_flags: <defaults>
</compile_context>

<pallas_src>
import jax
import jax.numpy as jnp
from jax.experimental import pallas as pl
from jax.experimental.pallas import tpu as pltpu


def _layernorm_kernel(x_ref, w_ref, b_ref, o_ref):
    # x_ref: (TILE_ROWS, C), w_ref/b_ref: (1, C), o_ref: (TILE_ROWS, C)
    x = x_ref[...].astype(jnp.float32)
    mu = jnp.mean(x, axis=-1, keepdims=True)                 # mean over last dim
    xc = x - mu
    var = jnp.mean(xc * xc, axis=-1, keepdims=True)          # unbiased=False variance
    inv = jax.lax.rsqrt(var + 1e-5)
    w = w_ref[...].astype(jnp.float32)
    b = b_ref[...].astype(jnp.float32)
    o_ref[...] = (xc * inv * w + b).astype(o_ref.dtype)


def _chip_tuning():
    """Per-generation knobs, keyed off physical VMEM (v7x=64 MiB/TC, v5e/v6e=128 MiB).

    Falls back to conservative v7x-safe values if the hardware query fails.
    """
    vmem_bytes = None
    try:
        info = pltpu.get_tpu_info()
        vmem_bytes = getattr(info, "vmem_capacity_bytes", None)
        if vmem_bytes is not None:
            vmem_bytes = int(vmem_bytes)
    except Exception:
        vmem_bytes = None

    if vmem_bytes is None or vmem_bytes <= (96 << 20):
        # v7x-like: 64 MiB VMEM per TC, two TCs share HBM.
        return dict(
            target_hbm_block_bytes=4 << 20,   # HBM bytes (input dtype) per grid step
            f32_block_cap_bytes=6 << 20,      # cap on the f32-upcast block footprint
            vmem_cap_bytes=48 << 20,          # leave regalloc/scratch headroom in 64 MiB
            min_grid_steps=8,                 # keep grid shardable across both TCs
        )
    # v5e / v6e: single TC, 128 MiB VMEM -> bigger blocks, fewer required steps.
    return dict(
        target_hbm_block_bytes=8 << 20,
        f32_block_cap_bytes=16 << 20,
        vmem_cap_bytes=96 << 20,
        min_grid_steps=3,                     # enough for prefetch/compute/writeback overlap
    )


def with_bias_layer_norm(x, weight, bias):
    """LayerNorm over the last dim of x: (x - mu) / sqrt(var + 1e-5) * weight + bias."""
    orig_shape = x.shape
    C = int(orig_shape[-1])
    assert weight.shape == (C,) and bias.shape == (C,)

    rows = 1
    for d in orig_shape[:-1]:
        rows *= int(d)
    x2 = x.reshape(rows, C)
    w2 = weight.reshape(1, C)
    b2 = bias.reshape(1, C)

    tune = _chip_tuning()
    itemsize = jnp.dtype(x.dtype).itemsize
    # Sublane packing: f32 -> 8 rows/tile, bf16 -> 16, int8/fp8 -> 32.
    row_align = max(8, 32 // itemsize)

    # Main throughput lever: size by HBM bytes actually moved (input dtype), so
    # bf16/int8 blocks are not 2-4x too small; cap the f32-upcast footprint so the
    # VMEM budget stays inside the per-generation cap.
    tile_rows = max(row_align, tune["target_hbm_block_bytes"] // (C * itemsize))
    tile_rows = min(tile_rows, max(row_align, tune["f32_block_cap_bytes"] // (C * 4)))
    tile_rows = max(row_align, (tile_rows // row_align) * row_align)

    # Keep >= min_grid_steps when there is enough work: 8 on v7x (dual-TC sharding
    # + pipeline depth), 3 on single-TC v5e/v6e (don't shrink the tile needlessly).
    min_grid_steps = tune["min_grid_steps"]
    if rows >= min_grid_steps * row_align:
        cap = -(-rows // min_grid_steps)             # ceil(rows / min_grid_steps)
        cap = -(-cap // row_align) * row_align       # round up to row_align
        tile_rows = min(tile_rows, cap)

    # Never make the block taller than the alignment-rounded row count.
    padded_rows = -(-rows // row_align) * row_align
    tile_rows = min(tile_rows, padded_rows)

    grid = (pl.cdiv(rows, tile_rows),)               # ragged tail handled by Pallas masking

    # VMEM budget: double-buffered in + out blocks (input dtype), ~4 f32
    # intermediates (upcast x, centered x, products), params, slack.
    blk_x = tile_rows * C * itemsize
    blk_f32 = tile_rows * C * 4
    vmem_budget = 4 * blk_x + 4 * blk_f32 + 4 * C * 4 + (1 << 20)
    vmem_cap = tune["vmem_cap_bytes"]

    # Guard (review concern): even the minimum block (row_align x full C) must fit,
    # since the single-pass reduction needs the full normalized dim resident.
    min_budget = 4 * row_align * C * itemsize + 4 * row_align * C * 4 + 4 * C * 4 + (1 << 20)
    assert min_budget <= vmem_cap, (
        f"normalized dim C={C} too large for a single-block last-dim reduction "
        f"(needs ~{min_budget} B VMEM > cap {vmem_cap} B)")
    # TODO(synk): add a C-split two-pass reduction fallback for very large C, and a
    # lane-repacked (k rows per 128 lanes) path for C < 128 workloads.

    vmem_limit = int(min(max(vmem_budget, 32 << 20), vmem_cap))

    out = pl.pallas_call(
        _layernorm_kernel,
        out_shape=jax.ShapeDtypeStruct((rows, C), x.dtype),
        grid_spec=pltpu.PrefetchScalarGridSpec(
            num_scalar_prefetch=0,
            grid=grid,
            in_specs=[
                pl.BlockSpec((tile_rows, C), lambda i: (i, 0)),
                pl.BlockSpec((1, C), lambda i: (0, 0)),
                pl.BlockSpec((1, C), lambda i: (0, 0)),
            ],
            out_specs=pl.BlockSpec((tile_rows, C), lambda i: (i, 0)),
        ),
        compiler_params=pltpu.CompilerParams(
            dimension_semantics=("parallel",),
            vmem_limit_bytes=vmem_limit,
        ),
    )(x2, w2, b2)

    return out.reshape(orig_shape)


def _reference(x, weight, bias):
    x32 = x.astype(jnp.float32)
    mu = jnp.mean(x32, axis=-1, keepdims=True)
    var = jnp.mean((x32 - mu) ** 2, axis=-1, keepdims=True)
    y = (x32 - mu) / jnp.sqrt(var + 1e-5) * weight.astype(jnp.float32) + bias.astype(jnp.float32)
    return y.astype(x.dtype)


if __name__ == "__main__":
    key = jax.random.PRNGKey(0)
    k1, k2, k3 = jax.random.split(key, 3)

    # Primary case: lane-dense hidden (multiple of 128), small shapes.
    # Module: WithBias_LayerNorm(normalized_shape=hidden); init weight=ones, bias=zeros.
    batch, seq, hidden = 2, 8, 128
    x = jax.random.normal(k1, (batch, seq, hidden), dtype=jnp.float32)
    weight = jnp.ones((hidden,), dtype=jnp.float32)
    bias = jnp.zeros((hidden,), dtype=jnp.float32)

    out = jax.block_until_ready(with_bias_layer_norm(x, weight, bias))
    assert out.shape == x.shape
    assert jnp.allclose(out, _reference(x, weight, bias), atol=1e-5, rtol=1e-5), "mismatch (dense case)"

    # Ragged-tail / small-C case: rows (= 3*5 = 15) not a multiple of the sublane
    # tile and C < 128 — exercises the masked tail block and the affine path.
    x_r = jax.random.normal(k2, (3, 5, 32), dtype=jnp.float32)
    w_r = jnp.linspace(0.5, 1.5, 32, dtype=jnp.float32)
    b_r = jnp.linspace(-0.25, 0.25, 32, dtype=jnp.float32)
    out_r = jax.block_until_ready(with_bias_layer_norm(x_r, w_r, b_r))
    assert jnp.allclose(out_r, _reference(x_r, w_r, b_r), atol=1e-5, rtol=1e-5), "mismatch (ragged case)"

    # bf16 case: exercises the itemsize-aware tile sizing (16-row sublane alignment)
    # and the f32-accumulate / bf16-store path.
    x_b = jax.random.normal(k3, (4, 16, 128), dtype=jnp.bfloat16)
    w_b = jnp.ones((128,), dtype=jnp.bfloat16)
    b_b = jnp.zeros((128,), dtype=jnp.bfloat16)
    out_b = jax.block_until_ready(with_bias_layer_norm(x_b, w_b, b_b))
    ref_b = _reference(x_b, w_b, b_b)
    assert jnp.allclose(out_b.astype(jnp.float32), ref_b.astype(jnp.float32),
                        atol=2e-2, rtol=2e-2), "mismatch (bf16 case)"

    print("KERNEL_OK")
</pallas_src>

<mosaic_0001>
module attributes {stable_mosaic.version = 11 : i64} {
  func.func @_layernorm_kernel(%arg0: i32, %arg1: memref<16x128xf32, #tpu.memory_space<vmem>>, %arg2: memref<1x128xf32, #tpu.memory_space<vmem>>, %arg3: memref<1x128xf32, #tpu.memory_space<vmem>>, %arg4: memref<16x128xf32, #tpu.memory_space<vmem>>) attributes {dimension_semantics = [#tpu.dimension_semantics<parallel>], iteration_bounds = array<i64: 1>, scalar_prefetch = 0 : i64, scratch_operands = 0 : i64, tpu.core_type = #tpu.core_type<tc>, window_params = [{transform_indices = @transform_0, window_bounds = array<i64: 16, 128>}, {pipeline_mode = #tpu.pipeline_mode<synchronous>, transform_indices = @transform_1, window_bounds = array<i64: 1, 128>}, {pipeline_mode = #tpu.pipeline_mode<synchronous>, transform_indices = @transform_2, window_bounds = array<i64: 1, 128>}, {transform_indices = @transform_3, window_bounds = array<i64: 16, 128>}]} {
    %c0 = arith.constant 0 : index
    %c0_0 = arith.constant 0 : index
    %0 = vector.load %arg1[%c0, %c0_0] : memref<16x128xf32, #tpu.memory_space<vmem>>, vector<16x128xf32>
    %cst = arith.constant dense<0.000000e+00> : vector<16xf32>
    %1 = vector.multi_reduction <add>, %0, %cst [1] : vector<16x128xf32> to vector<16xf32>
    %2 = vector.shape_cast %1 : vector<16xf32> to vector<16x1xf32>
    %cst_1 = arith.constant 1.280000e+02 : f32
    %3 = vector.broadcast %cst_1 : f32 to vector<16x1xf32>
    %4 = arith.divf %2, %3 : vector<16x1xf32>
    %5 = vector.broadcast %4 : vector<16x1xf32> to vector<16x128xf32>
    %6 = arith.subf %0, %5 : vector<16x128xf32>
    %7 = arith.mulf %6, %6 : vector<16x128xf32>
    %cst_2 = arith.constant dense<0.000000e+00> : vector<16xf32>
    %8 = vector.multi_reduction <add>, %7, %cst_2 [1] : vector<16x128xf32> to vector<16xf32>
    %9 = vector.shape_cast %8 : vector<16xf32> to vector<16x1xf32>
    %cst_3 = arith.constant 1.280000e+02 : f32
    %10 = vector.broadcast %cst_3 : f32 to vector<16x1xf32>
    %11 = arith.divf %9, %10 : vector<16x1xf32>
    %cst_4 = arith.constant 9.99999974E-6 : f32
    %12 = vector.broadcast %cst_4 : f32 to vector<16x1xf32>
    %13 = arith.addf %11, %12 : vector<16x1xf32>
    %14 = math.rsqrt %13 : vector<16x1xf32>
    %c0_5 = arith.constant 0 : index
    %c0_6 = arith.constant 0 : index
    %15 = vector.load %arg2[%c0_5, %c0_6] : memref<1x128xf32, #tpu.memory_space<vmem>>, vector<1x128xf32>
    %c0_7 = arith.constant 0 : index
    %c0_8 = arith.constant 0 : index
    %16 = vector.load %arg3[%c0_7, %c0_8] : memref<1x128xf32, #tpu.memory_space<vmem>>, vector<1x128xf32>
    %17 = vector.broadcast %14 : vector<16x1xf32> to vector<16x128xf32>
    %18 = arith.mulf %6, %17 : vector<16x128xf32>
    %19 = vector.broadcast %15 : vector<1x128xf32> to vector<16x128xf32>
    %20 = arith.mulf %18, %19 : vector<16x128xf32>
    %21 = vector.broadcast %16 : vector<1x128xf32> to vector<16x128xf32>
    %22 = arith.addf %20, %21 : vector<16x128xf32>
    %c0_9 = arith.constant 0 : index
    %c0_10 = arith.constant 0 : index
    %23 = vector.load %arg4[%c0_9, %c0_10] : memref<16x128xf32, #tpu.memory_space<vmem>>, vector<16x128xf32>
    tpu.vector_store %arg4[%c0_9, %c0_10], %22 {strides = array<i32>} : memref<16x128xf32, #tpu.memory_space<vmem>>, vector<16x128xf32>,
    return
  }
  func.func @transform_0(%arg0: i32) -> (i32, i32) {
    %c0_i32 = arith.constant 0 : i32
    %c0_i32_0 = arith.constant 0 : i32
    return %arg0, %c0_i32 : i32, i32
  }
  func.func @transform_1(%arg0: i32) -> (i32, i32) {
    %c0_i32 = arith.constant 0 : i32
    %c0_i32_0 = arith.constant 0 : i32
    %c0_i32_1 = arith.constant 0 : i32
    return %c0_i32, %c0_i32_0 : i32, i32
  }
  func.func @transform_2(%arg0: i32) -> (i32, i32) {
    %c0_i32 = arith.constant 0 : i32
    %c0_i32_0 = arith.constant 0 : i32
    %c0_i32_1 = arith.constant 0 : i32
    return %c0_i32, %c0_i32_0 : i32, i32
  }
  func.func @transform_3(%arg0: i32) -> (i32, i32) {
    %c0_i32 = arith.constant 0 : i32
    %c0_i32_0 = arith.constant 0 : i32
    return %arg0, %c0_i32 : i32, i32
  }
}

</mosaic_0001>

<llo_original>
// kernel: tpu_custom_call.1
$region0: #{tpu_custom_call.1}
  #allocation0 [shape = 'u32[]', space=smem, size = 0x4, offset = 0x4, fixed_abs, tag = 'smem constant byte address 0x4 - core index']
  #allocation1 [shape = 'u32[72,128]{1,0:T(1,128)}', space=vmem, size = 0x9000, scoped, tag = 'internal scratch']
  %s0 = inlined_call_operand.hbm [shape: f32[16,128], index: 0, kind: input, shape index: {}]
  %s1 = inlined_call_operand.hbm [shape: f32[1,128], index: 1, kind: input, shape index: {}]
  %s2 = inlined_call_operand.vmem [shape: f32[1,128], index: 2, kind: input, shape index: {}]
  %s3 = inlined_call_operand.hbm [shape: f32[16,128], index: 3, kind: output, shape index: {}]
  %s4 = sld [smem:[#allocation0]]
  $region30: #{tpu_custom_call.1} parent=0
    _
  %s6 = ssub.s32 1, %s4
  %s7 = scalar_select 0, %s6, %s4
  $region1: #{tpu_custom_call.1} parent=0
    #allocation2 [shape = 'u8[8192]{0}', space=vmem, size = 0x2000, scoped, tag = 'input window, operand 0, single buffered']
    #allocation3 [shape = 's32[1]{0}', space=sflag, size = 0x4, scoped, tag = 'scoped memory for tpu_custom_call.1']
    #allocation4 [shape = 's32[1]{0}', space=sflag, size = 0x4, scoped, tag = 'scoped memory for tpu_custom_call.1']
    #allocation5 [shape = 'u8[512]{0}', space=vmem, size = 0x400, scoped, tag = 'input window, operand 1, single buffered']
    #allocation6 [shape = 's32[1]{0}', space=sflag, size = 0x4, scoped, tag = 'scoped memory for tpu_custom_call.1']
    #allocation7 [shape = 'u8[8192]{0}', space=vmem, size = 0x2000, scoped, tag = 'output window, operand 0, single buffered']
    %8 = vsyncpa [#allocation3], 0
    %9 = vsyncpa [#allocation6], 0
    %10 = vsyncpa [#allocation4], 0
    // Predicated region
    $region2: #{tpu_custom_call.1} parent=1 // pred_check
      _
    $region3: #{tpu_custom_call.1} parent=1 // pred_check_branch
      %12 = sbr.rel (0) target = $region5
    $region4: #{tpu_custom_call.1} parent=1 // pred_region
      %14 = vsyncadd [#allocation3], 0
      %s15 = sshll.u32 %s0, 4
      %s16 = int_to_ptr.hbm [resolvable:$true] %s15
      %s17 = sshll.u32 [#allocation2], 4
      %s18 = int_to_ptr.vmem [resolvable:$true] %s17
      %23 = dma.hbm_to_vmem [thread:$0]  %s16, 256, %s18, [#allocation3], 128, 128, 8
    $region5: #{tpu_custom_call.1} parent=1 // pred_fallthru
      _
    // Predicated region
    $region6: #{tpu_custom_call.1} parent=1 // pred_check
      _
    $region7: #{tpu_custom_call.1} parent=1 // pred_check_branch
      %25 = sbr.rel (0) target = $region9
    $region8: #{tpu_custom_call.1} parent=1 // pred_region
      %27 = vsyncadd [#allocation6], 0
      %s29 = sshll.u32 %s1, 4
      %s30 = int_to_ptr.hbm [resolvable:$true] %s29
      %s31 = sshll.u32 [#allocation5], 4
      %s32 = int_to_ptr.vmem [resolvable:$true] %s31
      %34 = dma.hbm_to_vmem [thread:$0]  %s30, 16, %s32, [#allocation6]
    $region9: #{tpu_custom_call.1} parent=1 // pred_fallthru
      _
    // Predicated region
    $region10: #{tpu_custom_call.1} parent=1 // pred_check
      _
    $region11: #{tpu_custom_call.1} parent=1 // pred_check_branch
      %36 = sbr.rel (0) target = $region13
    $region12: #{tpu_custom_call.1} parent=1 // pred_region
      _
    $region13: #{tpu_custom_call.1} parent=1 // pred_fallthru
      _
    // Predicated region
    $region14: #{tpu_custom_call.1} parent=1 // pred_check
      _
    $region15: #{tpu_custom_call.1} parent=1 // pred_check_branch
      %38 = sbr.rel (0) target = $region17
    $region16: #{tpu_custom_call.1} parent=1 // pred_region
      %40 = dma.done [#allocation3], 256
    $region17: #{tpu_custom_call.1} parent=1 // pred_fallthru
      _
    // Predicated region
    $region18: #{tpu_custom_call.1} parent=1 // pred_check
      _
    $region19: #{tpu_custom_call.1} parent=1 // pred_check_branch
      %42 = sbr.rel (0) target = $region21
    $region20: #{tpu_custom_call.1} parent=1 // pred_region
      %44 = dma.done [#allocation6], 16
    $region21: #{tpu_custom_call.1} parent=1 // pred_fallthru
      _
    %v45 = vld [vmem:[#allocation2] sm:$0xff]
    %v46 = vld [vmem:[#allocation2 + $0x8] sm:$0xff]
    %47 = vadd.xlane.f32.xlu0 %v45
    %v48 = vpop.xlane.xlu0 %47
    %49 = vadd.xlane.f32.xlu0 %v46
    %v50 = vpop.xlane.xlu0 %49
    %v51 = vrcp.pop 128.0
    %v52 = vmul.f32 128.0, %v51
    %v53 = vsub.f32 1.0, %v52
    %v54 = vmul.f32 %v51, %v53
    %v55 = vadd.f32 %v51, %v54
    %vm56 = vweird.f32 %v51
    %v57 = vsel %vm56, %v51, %v55
    %v58 = vmul.f32 %v48, %v57
    %v59 = vmul.f32 %v50, %v57
    %v60 = vsub.f32 %v45, %v58
    %v61 = vsub.f32 %v46, %v59
    %v62 = vmul.f32 %v60, %v60
    %v63 = vmul.f32 %v61, %v61
    %64 = vadd.xlane.f32.xlu0 %v62
    %v65 = vpop.xlane.xlu0 %64
    %66 = vadd.xlane.f32.xlu0 %v63
    %v67 = vpop.xlane.xlu0 %66
    %v68 = vmul.f32 %v65, %v57
    %v69 = vmul.f32 %v67, %v57
    %v70 = vadd.f32 %v68, 1e-05
    %v71 = vadd.f32 %v69, 1e-05
    %v72 = vrsqrt.pop %v70
    %v73 = vmul.f32 %v72, %v70
    %v74 = vmul.f32 %v73, %v72
    %v75 = vmul.f32 0.5, %v74
    %v76 = vsub.f32 1.5, %v75
    %v77 = vmul.f32 %v72, %v76
    %vm78 = vweird.f32 %v70
    %vm79 = vweird.f32 %v72
    %vm80 = vmor %vm78, %vm79
    %v81 = vsel %vm80, %v72, %v77
    %v82 = vrsqrt.pop %v71
    %v83 = vmul.f32 %v82, %v71
    %v84 = vmul.f32 %v83, %v82
    %v85 = vmul.f32 0.5, %v84
    %v86 = vsub.f32 1.5, %v85
    %v87 = vmul.f32 %v82, %v86
    %vm88 = vweird.f32 %v71
    %vm89 = vweird.f32 %v82
    %vm90 = vmor %vm88, %vm89
    %v91 = vsel %vm90, %v82, %v87
    %v92 = vld [vmem:[#allocation5] sm:$0x1]
    %v93 = vld [vmem:[%s2] sm:$0x1]
    %v94 = vmul.f32 %v60, %v81
    %v95 = vmul.f32 %v61, %v91
    %v97 = vperm.slane %v92, 0
    %v99 = vmul.f32 %v94, %v97
    %v100 = vmul.f32 %v95, %v97
    %v102 = vperm.slane %v93, 0
    %v104 = vadd.f32 %v99, %v102
    %v105 = vadd.f32 %v100, %v102
    %106 = vst [vmem:[#allocation7] sm:$0xff] %v104
    %107 = vst [vmem:[#allocation7 + $0x8] sm:$0xff] %v105
    // Predicated region
    $region22: #{tpu_custom_call.1} parent=1 // pred_check
      _
    $region23: #{tpu_custom_call.1} parent=1 // pred_check_branch
      %109 = sbr.rel (0) target = $region25
    $region24: #{tpu_custom_call.1} parent=1 // pred_region
      %111 = vsyncadd [#allocation4], 0
      %s112 = sshll.u32 [#allocation7], 4
      %s113 = int_to_ptr.vmem [resolvable:$true] %s112
      %s114 = sshll.u32 %s3, 4
      %s115 = int_to_ptr.hbm [resolvable:$true] %s114
      %120 = dma.vmem_to_hbm [thread:$0]  %s113, 256, %s115, [#allocation4], 128, 128, 8
    $region25: #{tpu_custom_call.1} parent=1 // pred_fallthru
      _
    // Predicated region
    $region26: #{tpu_custom_call.1} parent=1 // pred_check
      _
    $region27: #{tpu_custom_call.1} parent=1 // pred_check_branch
      %122 = sbr.rel (0) target = $region29
    $region28: #{tpu_custom_call.1} parent=1 // pred_region
      %124 = dma.done [#allocation4], 256
    $region29: #{tpu_custom_call.1} parent=1 // pred_fallthru
      _
    %125 = vsyncpa [#allocation3], 1
    %126 = vsyncpa [#allocation6], 1
    %127 = vsyncpa [#allocation4], 1

</llo_original>
